<compile_context>
chip_gen: v6e
topology: v6e:2x2x1
jax: 0.10.0
libtpu: 0.0.40
codegen_flags: <defaults>
</compile_context>

<pallas_src>
import functools

import jax
import jax.numpy as jnp
from jax.experimental import pallas as pl
from jax.experimental.pallas import tpu as pltpu

_LANES = 128


def _gsm_kernel(x_ref, mean_ref, var_ref, w_ref, *, K):
    # x block: (bn, 2K+1, tile_rows, 128).  Channels on a leading dim, so
    # slicing below never crosses an (8,128) tile boundary.
    x = x_ref[...].astype(jnp.float32)
    w = x[:, :K]                   # mixture-weight logits  (bn, K, tr, 128)
    v = x[:, K:2 * K]              # log-variances          (bn, K, tr, 128)
    m = x[:, 2 * K:2 * K + 1]      # mean                   (bn, 1, tr, 128)

    # mean: pass-through
    mean_ref[...] = m.astype(mean_ref.dtype)

    # variances: elementwise exp (EUP)
    var_ref[...] = jnp.exp(v).astype(var_ref.dtype)

    # weights: softmax over the K channels (Softmax2d == softmax over dim=1).
    # max/sum over the leading K dim are K-1 elementwise VPU ops, no XLU.
    wmax = jnp.max(w, axis=1, keepdims=True)
    e = jnp.exp(w - wmax)
    denom = jnp.sum(e, axis=1, keepdims=True)
    w_ref[...] = (e / denom).astype(w_ref.dtype)   # exact divide: sums to 1


def _vmem_capacity_bytes():
    """Per-generation physical VMEM (128 MiB v5e/v6e, 64 MiB v7x)."""
    try:
        return int(pltpu.get_tpu_info().vmem_capacity_bytes)
    except Exception:
        return 64 << 20  # conservative fallback (v7x size), valid everywhere


def _sublane_multiple(dtype):
    itemsize = jnp.dtype(dtype).itemsize
    return max(8, 32 // max(itemsize, 1))  # 8 for f32, 16 for bf16, 32 for i8


def _choose_tiling(N, C, R, dtype, vmem_cap):
    """Pick (bn, tile_rows): lane/sublane-dense blocks, padded-size aware."""
    itemsize = jnp.dtype(dtype).itemsize
    sub = _sublane_multiple(dtype)

    # Bytes per (row of 128 lanes) per image: input C channels + output
    # (1 + K + K) = C channels.  Channel-leading layout => no sublane waste.
    per_row_bytes = 2 * C * _LANES * itemsize

    # Double-buffered working-set target: ~half of physical VMEM, capped so
    # v7x (64 MiB) keeps room for Mosaic internal scratch.
    budget = max(16 << 20, min(vmem_cap // 2, 64 << 20))
    step_bytes = budget // 2  # one live block set (pre double-buffering)

    rows_pad_full = pl.cdiv(R, sub) * sub
    if rows_pad_full * per_row_bytes <= step_bytes:
        # Whole image per step; fold images to amortize per-step overhead ...
        tile_rows = R
        bn = max(1, min(N, step_bytes // max(rows_pad_full * per_row_bytes, 1)))
        # ... but keep >= 2 grid steps so both v7x TensorCores get work.
        if N >= 2 and pl.cdiv(N, bn) < 2:
            bn = pl.cdiv(N, 2)
    else:
        # One image per step; tile the row axis sublane-densely.
        bn = 1
        tile_rows = max(sub, (step_bytes // per_row_bytes) // sub * sub)
        if tile_rows >= R:
            tile_rows = R
    return bn, tile_rows


def gaussian_scale_mixture_output(x, num_gaussians):
    """x: (N, 2K+1, H, W) NCHW.  Returns (mean, variances, weights)."""
    N, C, H, W = x.shape
    K = num_gaussians
    assert C == 2 * K + 1
    HW = H * W
    dtype = x.dtype
    itemsize = jnp.dtype(dtype).itemsize

    # Lane-dense spatial layout: pad HW up to a multiple of 128 and fold it
    # into (rows, 128) so stores are unmasked full-lane vst's.
    HW_pad = pl.cdiv(HW, _LANES) * _LANES
    R = HW_pad // _LANES
    x3 = x.reshape(N, C, HW)
    if HW_pad != HW:
        x3 = jnp.pad(x3, ((0, 0), (0, 0), (0, HW_pad - HW)))
    x4 = x3.reshape(N, C, R, _LANES)

    vmem_cap = _vmem_capacity_bytes()
    bn, tile_rows = _choose_tiling(N, C, R, dtype, vmem_cap)
    grid = (pl.cdiv(N, bn), pl.cdiv(R, tile_rows))

    # VMEM request from the actual (sublane-padded) block sizes, double
    # buffered, plus fixed headroom; clamped under physical VMEM.
    sub = _sublane_multiple(dtype)
    tr_pad = pl.cdiv(tile_rows, sub) * sub
    in_block = bn * C * tr_pad * _LANES * itemsize
    out_block = bn * (2 * K + 1) * tr_pad * _LANES * itemsize
    needed = 2 * (in_block + out_block)                 # double-buffered
    vmem_limit = int(min(needed + (8 << 20), max(vmem_cap - (8 << 20), 16 << 20)))
    vmem_limit = max(vmem_limit, 16 << 20)

    kernel = functools.partial(_gsm_kernel, K=K)

    mean, var, w = pl.pallas_call(
        kernel,
        out_shape=(
            jax.ShapeDtypeStruct((N, 1, R, _LANES), dtype),
            jax.ShapeDtypeStruct((N, K, R, _LANES), dtype),
            jax.ShapeDtypeStruct((N, K, R, _LANES), dtype),
        ),
        grid=grid,
        in_specs=[pl.BlockSpec((bn, C, tile_rows, _LANES),
                               lambda n, r: (n, 0, r, 0))],
        out_specs=(
            pl.BlockSpec((bn, 1, tile_rows, _LANES), lambda n, r: (n, 0, r, 0)),
            pl.BlockSpec((bn, K, tile_rows, _LANES), lambda n, r: (n, 0, r, 0)),
            pl.BlockSpec((bn, K, tile_rows, _LANES), lambda n, r: (n, 0, r, 0)),
        ),
        compiler_params=pltpu.CompilerParams(
            dimension_semantics=("parallel", "parallel"),
            vmem_limit_bytes=vmem_limit,
        ),
    )(x4)

    def _unfold(y, ch):
        y = y.reshape(N, ch, HW_pad)
        if HW_pad != HW:
            y = y[:, :, :HW]
        return y.reshape(N, ch, H, W)

    return _unfold(mean, 1), _unfold(var, K), _unfold(w, K)


def _reference(x, num_gaussians):
    K = num_gaussians
    weights = x[:, :K]
    variances = x[:, K:2 * K]
    mean = x[:, 2 * K:]
    return mean, jnp.exp(variances), jax.nn.softmax(weights, axis=1)


if __name__ == "__main__":
    num_gaussians = 4
    N, H, W = 2, 16, 16
    C = 2 * num_gaussians + 1  # 9

    key = jax.random.PRNGKey(0)
    x = jax.random.normal(key, (N, C, H, W), dtype=jnp.float32)

    mean, var, w = gaussian_scale_mixture_output(x, num_gaussians)
    jax.block_until_ready((mean, var, w))

    mean_r, var_r, w_r = _reference(x, num_gaussians)
    assert mean.shape == (N, 1, H, W)
    assert var.shape == (N, num_gaussians, H, W)
    assert w.shape == (N, num_gaussians, H, W)
    assert jnp.allclose(mean, mean_r, atol=1e-6)
    assert jnp.allclose(var, var_r, rtol=1e-5, atol=1e-6)
    assert jnp.allclose(w, w_r, rtol=1e-5, atol=1e-5)

    print("KERNEL_OK")
</pallas_src>

<mosaic_0001>
module attributes {stable_mosaic.version = 11 : i64} {
  func.func @_gsm_kernel(%arg0: i32, %arg1: i32, %arg2: memref<1x9x2x128xf32, #tpu.memory_space<vmem>>, %arg3: memref<1x1x2x128xf32, #tpu.memory_space<vmem>>, %arg4: memref<1x4x2x128xf32, #tpu.memory_space<vmem>>, %arg5: memref<1x4x2x128xf32, #tpu.memory_space<vmem>>) attributes {dimension_semantics = [#tpu.dimension_semantics<parallel>, #tpu.dimension_semantics<parallel>], iteration_bounds = array<i64: 2, 1>, scalar_prefetch = 0 : i64, scratch_operands = 0 : i64, tpu.core_type = #tpu.core_type<tc>, window_params = [{transform_indices = @transform_0, window_bounds = array<i64: 1, 9, 2, 128>}, {transform_indices = @transform_1, window_bounds = array<i64: 1, 1, 2, 128>}, {transform_indices = @transform_2, window_bounds = array<i64: 1, 4, 2, 128>}, {transform_indices = @transform_3, window_bounds = array<i64: 1, 4, 2, 128>}]} {
    %c0 = arith.constant 0 : index
    %c0_0 = arith.constant 0 : index
    %c0_1 = arith.constant 0 : index
    %c0_2 = arith.constant 0 : index
    %0 = vector.load %arg2[%c0, %c0_0, %c0_1, %c0_2] : memref<1x9x2x128xf32, #tpu.memory_space<vmem>>, vector<1x9x2x128xf32>
    %1 = vector.extract_strided_slice %0 {offsets = [0, 0, 0, 0], sizes = [1, 4, 2, 128], strides = [1, 1, 1, 1]} : vector<1x9x2x128xf32> to vector<1x4x2x128xf32>
    %2 = vector.extract_strided_slice %0 {offsets = [0, 4, 0, 0], sizes = [1, 4, 2, 128], strides = [1, 1, 1, 1]} : vector<1x9x2x128xf32> to vector<1x4x2x128xf32>
    %3 = vector.extract_strided_slice %0 {offsets = [0, 8, 0, 0], sizes = [1, 1, 2, 128], strides = [1, 1, 1, 1]} : vector<1x9x2x128xf32> to vector<1x1x2x128xf32>
    %c0_3 = arith.constant 0 : index
    %c0_4 = arith.constant 0 : index
    %c0_5 = arith.constant 0 : index
    %c0_6 = arith.constant 0 : index
    %4 = vector.load %arg3[%c0_3, %c0_4, %c0_5, %c0_6] : memref<1x1x2x128xf32, #tpu.memory_space<vmem>>, vector<1x1x2x128xf32>
    tpu.vector_store %arg3[%c0_3, %c0_4, %c0_5, %c0_6], %3 {strides = array<i32>} : memref<1x1x2x128xf32, #tpu.memory_space<vmem>>, vector<1x1x2x128xf32>,
    %5 = math.exp %2 : vector<1x4x2x128xf32>
    %c0_7 = arith.constant 0 : index
    %c0_8 = arith.constant 0 : index
    %c0_9 = arith.constant 0 : index
    %c0_10 = arith.constant 0 : index
    %6 = vector.load %arg4[%c0_7, %c0_8, %c0_9, %c0_10] : memref<1x4x2x128xf32, #tpu.memory_space<vmem>>, vector<1x4x2x128xf32>
    tpu.vector_store %arg4[%c0_7, %c0_8, %c0_9, %c0_10], %5 {strides = array<i32>} : memref<1x4x2x128xf32, #tpu.memory_space<vmem>>, vector<1x4x2x128xf32>,
    %cst = arith.constant dense<0xFF800000> : vector<1x2x128xf32>
    %7 = vector.multi_reduction <maximumf>, %1, %cst [1] : vector<1x4x2x128xf32> to vector<1x2x128xf32>
    %8 = vector.shape_cast %7 : vector<1x2x128xf32> to vector<1x1x2x128xf32>
    %9 = vector.broadcast %8 : vector<1x1x2x128xf32> to vector<1x4x2x128xf32>
    %10 = arith.subf %1, %9 : vector<1x4x2x128xf32>
    %11 = math.exp %10 : vector<1x4x2x128xf32>
    %cst_11 = arith.constant dense<0.000000e+00> : vector<1x2x128xf32>
    %12 = vector.multi_reduction <add>, %11, %cst_11 [1] : vector<1x4x2x128xf32> to vector<1x2x128xf32>
    %13 = vector.shape_cast %12 : vector<1x2x128xf32> to vector<1x1x2x128xf32>
    %14 = vector.broadcast %13 : vector<1x1x2x128xf32> to vector<1x4x2x128xf32>
    %15 = arith.divf %11, %14 : vector<1x4x2x128xf32>
    %c0_12 = arith.constant 0 : index
    %c0_13 = arith.constant 0 : index
    %c0_14 = arith.constant 0 : index
    %c0_15 = arith.constant 0 : index
    %16 = vector.load %arg5[%c0_12, %c0_13, %c0_14, %c0_15] : memref<1x4x2x128xf32, #tpu.memory_space<vmem>>, vector<1x4x2x128xf32>
    tpu.vector_store %arg5[%c0_12, %c0_13, %c0_14, %c0_15], %15 {strides = array<i32>} : memref<1x4x2x128xf32, #tpu.memory_space<vmem>>, vector<1x4x2x128xf32>,
    return
  }
  func.func @transform_0(%arg0: i32, %arg1: i32) -> (i32, i32, i32, i32) {
    %c0_i32 = arith.constant 0 : i32
    %c0_i32_0 = arith.constant 0 : i32
    %c0_i32_1 = arith.constant 0 : i32
    return %arg0, %c0_i32, %arg1, %c0_i32_0 : i32, i32, i32, i32
  }
  func.func @transform_1(%arg0: i32, %arg1: i32) -> (i32, i32, i32, i32) {
    %c0_i32 = arith.constant 0 : i32
    %c0_i32_0 = arith.constant 0 : i32
    %c0_i32_1 = arith.constant 0 : i32
    return %arg0, %c0_i32, %arg1, %c0_i32_0 : i32, i32, i32, i32
  }
  func.func @transform_2(%arg0: i32, %arg1: i32) -> (i32, i32, i32, i32) {
    %c0_i32 = arith.constant 0 : i32
    %c0_i32_0 = arith.constant 0 : i32
    %c0_i32_1 = arith.constant 0 : i32
    return %arg0, %c0_i32, %arg1, %c0_i32_0 : i32, i32, i32, i32
  }
  func.func @transform_3(%arg0: i32, %arg1: i32) -> (i32, i32, i32, i32) {
    %c0_i32 = arith.constant 0 : i32
    %c0_i32_0 = arith.constant 0 : i32
    %c0_i32_1 = arith.constant 0 : i32
    return %arg0, %c0_i32, %arg1, %c0_i32_0 : i32, i32, i32, i32
  }
}

</mosaic_0001>

<llo_original>
// kernel: tpu_custom_call.1
$region0: #{tpu_custom_call.1}
  #allocation0 [shape = 'u32[]', space=smem, size = 0x4, offset = 0x4, fixed_abs, tag = 'smem constant byte address 0x4 - core index']
  #allocation1 [shape = 'u32[144,128]{1,0:T(1,128)}', space=vmem, size = 0x12000, scoped, tag = 'internal scratch']
  %s0 = inlined_call_operand.hbm [shape: f32[2,9,2,128], index: 0, kind: input, shape index: {}]
  %s1 = inlined_call_operand.hbm [shape: f32[2,1,2,128], index: 1, kind: output, shape index: {0}]
  %s2 = inlined_call_operand.hbm [shape: f32[2,4,2,128], index: 2, kind: output, shape index: {1}]
  %s3 = inlined_call_operand.hbm [shape: f32[2,4,2,128], index: 3, kind: output, shape index: {2}]
  %4 = xla_tuple %s1, %s2, %s3
  %s5 = sld [smem:[#allocation0]]
  $region57: #{tpu_custom_call.1} parent=0
    _
  %s7 = ssub.s32 1, %s5
  %s8 = scalar_select 0, %s7, %s5
  $region1: #{tpu_custom_call.1} parent=0
    #allocation2 [shape = 'u8[18432]{0}', space=vmem, size = 0x4800, scoped, tag = 'input window, operand 0']
    #allocation3 [shape = 's32[2]{0}', space=sflag, size = 0x8, scoped, tag = 'scoped memory for tpu_custom_call.1']
    #allocation4 [shape = 's32[2]{0}', space=sflag, size = 0x8, scoped, tag = 'scoped memory for tpu_custom_call.1']
    #allocation5 [shape = 'u8[2048]{0}', space=vmem, size = 0x800, scoped, tag = 'output window, operand 0']
    #allocation6 [shape = 'u8[8192]{0}', space=vmem, size = 0x2000, scoped, tag = 'output window, operand 1']
    #allocation7 [shape = 's32[2]{0}', space=sflag, size = 0x8, scoped, tag = 'scoped memory for tpu_custom_call.1']
    #allocation8 [shape = 'u8[8192]{0}', space=vmem, size = 0x2000, scoped, tag = 'output window, operand 2']
    %9 = vsyncpa [#allocation3], 0
    %s10 = scalar_lea.sflag [#allocation3], 1
    %11 = vsyncpa %s10, 0
    %12 = vsyncpa [#allocation4], 0
    %s13 = scalar_lea.sflag [#allocation4], 1
    %14 = vsyncpa %s13, 0
    %15 = vsyncpa [#allocation7], 0
    %s16 = scalar_lea.sflag [#allocation7], 1
    %17 = vsyncpa %s16, 0
    loop: start=0, step=1, limit=4
    $region2: #{tpu_custom_call.1} parent=1 // loop_pre_header
      _
    $region3: #{tpu_custom_call.1} parent=1 // loop_header
      %s19 = sphi 0, %s23
      %p20 = scmp.ge.s32.totalorder %s19, 4
      %s26 = sphi 0, %s38
      %s27 = sphi 0, %s34
      %s28 = sphi 0, %s26
      %s29 = sphi 0, %s27
      %s30 = sphi 0, %s28
      %s31 = sphi 0, %s29
      %s43 = sphi 0, %s45
      %s46 = sphi 0, %s43
      %s47 = sphi 0, %s46
      %s63 = sphi 0, %s47
      %s71 = sphi 0, %s73
      %s74 = sphi 0, %s71
      %s75 = sphi 0, %s74
      %s91 = sphi 0, %s75
      %s99 = sphi 0, %s101
      %s102 = sphi 0, %s99
      %s103 = sphi 0, %s102
      %s119 = sphi 0, %s103
      %s127 = sphi 0, %s129
      %s130 = sphi 0, %s127
      %s131 = sphi 0, %s130
      %s147 = sphi 0, %s131
    $region4: #{tpu_custom_call.1} parent=1 // loop_header_branch
      %22 = sbr.rel (%p20) target = $region8
    $region5: #{tpu_custom_call.1} parent=1 // loop_body
      %s24 = ssub.s32 %s19, 1
      %s25 = ssub.s32 %s19, 2
      %s32 = sadd.s32 1, %s27
      %p33 = scmp.ge.s32.totalorder %s32, 1
      %s34 = scalar_select %p33, 0, %s32
      %s35 = sadd.s32 1, %s26
      %s36 = scalar_select %p33, %s35, %s26
      %p37 = scmp.ge.s32.totalorder %s36, 2
      %s38 = scalar_select %p37, 0, %s36
      %s39 = ssub.s32 %s26, %s38
      %s40 = ssub.s32 %s27, %s34
      %s41 = sor.u32 %s39, %s40
      %p42 = scmp.eq.s32.totalorder %s41, 0
      %s44 = sadd.s32 %s43, 1
      %s45 = scalar_select %p42, %s43, %s44
      %p48 = pneg %p42
      %p49 = scmp.eq.s32.totalorder %s19, 1
      %p50 = por %p48, %p49
      %p51 = scmp.ne.s32.totalorder %s43, %s46
      %p52 = scmp.eq.s32.totalorder %s19, 0
      %p53 = por %p51, %p52
      %p54 = scmp.ne.s32.totalorder %s43, %s46
      %p55 = scmp.eq.s32.totalorder %s24, 1
      %p56 = por %p54, %p55
      %p57 = scmp.ne.s32.totalorder %s46, %s47
      %p58 = scmp.eq.s32.totalorder %s24, 0
      %p59 = por %p57, %p58
      %p60 = scmp.ne.s32.totalorder %s46, %s47
      %p61 = scmp.eq.s32.totalorder %s25, 1
      %p62 = por %p60, %p61
      %p64 = scmp.ne.s32.totalorder %s47, %s63
      %p65 = scmp.eq.s32.totalorder %s25, 0
      %p66 = por %p64, %p65
      %s67 = ssub.s32 %s26, %s38
      %s68 = ssub.s32 %s27, %s34
      %s69 = sor.u32 %s67, %s68
      %p70 = scmp.eq.s32.totalorder %s69, 0
      %s72 = sadd.s32 %s71, 1
      %s73 = scalar_select %p70, %s71, %s72
      %p76 = pneg %p70
      %p77 = scmp.eq.s32.totalorder %s19, 1
      %p78 = por %p76, %p77
      %p79 = scmp.ne.s32.totalorder %s71, %s74
      %p80 = scmp.eq.s32.totalorder %s19, 0
      %p81 = por %p79, %p80
      %p82 = scmp.ne.s32.totalorder %s71, %s74
      %p83 = scmp.eq.s32.totalorder %s24, 1
      %p84 = por %p82, %p83
      %p85 = scmp.ne.s32.totalorder %s74, %s75
      %p86 = scmp.eq.s32.totalorder %s24, 0
      %p87 = por %p85, %p86
      %p88 = scmp.ne.s32.totalorder %s74, %s75
      %p89 = scmp.eq.s32.totalorder %s25, 1
      %p90 = por %p88, %p89
      %p92 = scmp.ne.s32.totalorder %s75, %s91
      %p93 = scmp.eq.s32.totalorder %s25, 0
      %p94 = por %p92, %p93
      %s95 = ssub.s32 %s26, %s38
      %s96 = ssub.s32 %s27, %s34
      %s97 = sor.u32 %s95, %s96
      %p98 = scmp.eq.s32.totalorder %s97, 0
      %s100 = sadd.s32 %s99, 1
      %s101 = scalar_select %p98, %s99, %s100
      %p104 = pneg %p98
      %p105 = scmp.eq.s32.totalorder %s19, 1
      %p106 = por %p104, %p105
      %p107 = scmp.ne.s32.totalorder %s99, %s102
      %p108 = scmp.eq.s32.totalorder %s19, 0
      %p109 = por %p107, %p108
      %p110 = scmp.ne.s32.totalorder %s99, %s102
      %p111 = scmp.eq.s32.totalorder %s24, 1
      %p112 = por %p110, %p111
      %p113 = scmp.ne.s32.totalorder %s102, %s103
      %p114 = scmp.eq.s32.totalorder %s24, 0
      %p115 = por %p113, %p114
      %p116 = scmp.ne.s32.totalorder %s102, %s103
      %p117 = scmp.eq.s32.totalorder %s25, 1
      %p118 = por %p116, %p117
      %p120 = scmp.ne.s32.totalorder %s103, %s119
      %p121 = scmp.eq.s32.totalorder %s25, 0
      %p122 = por %p120, %p121
      %s123 = ssub.s32 %s26, %s38
      %s124 = ssub.s32 %s27, %s34
      %s125 = sor.u32 %s123, %s124
      %p126 = scmp.eq.s32.totalorder %s125, 0
      %s128 = sadd.s32 %s127, 1
      %s129 = scalar_select %p126, %s127, %s128
      %p132 = pneg %p126
      %p133 = scmp.eq.s32.totalorder %s19, 1
      %p134 = por %p132, %p133
      %p135 = scmp.ne.s32.totalorder %s127, %s130
      %p136 = scmp.eq.s32.totalorder %s19, 0
      %p137 = por %p135, %p136
      %p138 = scmp.ne.s32.totalorder %s127, %s130
      %p139 = scmp.eq.s32.totalorder %s24, 1
      %p140 = por %p138, %p139
      %p141 = scmp.ne.s32.totalorder %s130, %s131
      %p142 = scmp.eq.s32.totalorder %s24, 0
      %p143 = por %p141, %p142
      %p144 = scmp.ne.s32.totalorder %s130, %s131
      %p145 = scmp.eq.s32.totalorder %s25, 1
      %p146 = por %p144, %p145
      %p148 = scmp.ne.s32.totalorder %s131, %s147
      %p149 = scmp.eq.s32.totalorder %s25, 0
      %p150 = por %p148, %p149
      %p151 = scmp.le.s32.totalorder 1, %s19
      %p152 = scmp.lt.s32.totalorder %s19, 3
      %p153 = pnand %p151, %p152
      %p154 = pneg %p153
      // Predicated region
      $region9: #{tpu_custom_call.1} parent=5 // pred_check
        _
      $region10: #{tpu_custom_call.1} parent=5 // pred_check_branch
        %156 = sbr.rel (%p153) target = $region12
      $region11: #{tpu_custom_call.1} parent=5 // pred_region
        %s157 = ssub.s32 %s19, 1
      $region12: #{tpu_custom_call.1} parent=5 // pred_fallthru
        _
      %p158 = scmp.lt.s32.totalorder %s19, 2
      // Predicated region
      $region13: #{tpu_custom_call.1} parent=5 // pred_check
        %p159 = pneg %p158
      $region14: #{tpu_custom_call.1} parent=5 // pred_check_branch
        %161 = sbr.rel (%p159) target = $region16
      $region15: #{tpu_custom_call.1} parent=5 // pred_region
        // Predicated region
        $region17: #{tpu_custom_call.1} parent=15 // pred_check
          %p162 = pneg %p53
        $region18: #{tpu_custom_call.1} parent=15 // pred_check_branch
          %164 = sbr.rel (%p162) target = $region20
        $region19: #{tpu_custom_call.1} parent=15 // pred_region
          %s165 = sand.u32 %s43, 1
          %s166 = scalar_lea.sflag [#allocation3], %s165
          %s167 = sand.u32 %s43, 1
          %s168 = smul.addr %s167, 18
          %s169 = scalar_lea.vmem [#allocation2], %s168
          %s171 = ssub.s32 288, 288
          %172 = vsyncadd %s166, %s171
          %s173 = smul.addr %s26, 9
          %s174 = sadd.s32 %s27, %s173
          %s175 = smul.addr %s174, 32
          %s176 = scalar_lea.hbm %s0, %s175
          %s177 = sshll.u32 %s169, 4
          %s178 = int_to_ptr.vmem [resolvable:$true] %s177
          %183 = dma.hbm_to_vmem [thread:$0]  %s176, 288, %s178, %s166, 32, 32, 2
        $region20: #{tpu_custom_call.1} parent=15 // pred_fallthru
          _
      $region16: #{tpu_custom_call.1} parent=5 // pred_fallthru
        _
      %p184 = scmp.le.s32.totalorder 1, %s19
      %p185 = scmp.lt.s32.totalorder %s19, 3
      %p186 = pnand %p184, %p185
      %p187 = pneg %p186
      // Predicated region
      $region21: #{tpu_custom_call.1} parent=5 // pred_check
        _
      $region22: #{tpu_custom_call.1} parent=5 // pred_check_branch
        %189 = sbr.rel (%p186) target = $region24
      $region23: #{tpu_custom_call.1} parent=5 // pred_region
        %s190 = ssub.s32 %s19, 1
        %s191 = sand.u32 %s46, 1
        %s192 = scalar_lea.sflag [#allocation3], %s191
        %s193 = sand.u32 %s46, 1
        %s194 = smul.addr %s193, 18
        %s195 = scalar_lea.vmem [#allocation2], %s194
        // Predicated region
        $region25: #{tpu_custom_call.1} parent=23 // pred_check
          %p196 = pneg %p59
        $region26: #{tpu_custom_call.1} parent=23 // pred_check_branch
          %198 = sbr.rel (%p196) target = $region28
        $region27: #{tpu_custom_call.1} parent=23 // pred_region
          %199 = dma.done %s192, 288
        $region28: #{tpu_custom_call.1} parent=23 // pred_fallthru
          _
        %s200 = sand.u32 %s46, 1
        %s201 = scalar_lea.sflag [#allocation3], %s200
        %s202 = sand.u32 %s46, 1
        %s203 = smul.addr %s202, 18
        %s204 = scalar_lea.vmem [#allocation2], %s203
        %p205 = pneg %p59
        %p206 = pneg %p56
        %p207 = pneg %p87
        %p208 = pneg %p84
        %s209 = sand.u32 %s74, 1
        %s210 = scalar_lea.sflag [#allocation4], %s209
        %s211 = sand.u32 %s74, 1
        %s212 = smul.addr %s211, 2
        %s213 = scalar_lea.vmem [#allocation5], %s212
        %p214 = pneg %p115
        %p215 = pneg %p112
        %s216 = sand.u32 %s24, 1
        %s217 = scalar_lea.sflag [#allocation7], %s216
        %s218 = sand.u32 %s102, 1
        %s219 = smul.addr %s218, 8
        %s220 = scalar_lea.vmem [#allocation6], %s219
        %p221 = pneg %p143
        %p222 = pneg %p140
        %s223 = sand.u32 %s24, 1
        %s224 = scalar_lea.sflag [#allocation7], %s223
        %s225 = sand.u32 %s130, 1
        %s226 = smul.addr %s225, 8
        %s227 = scalar_lea.vmem [#allocation8], %s226
        %v228 = vld [vmem:[%s195] sm:$0x3]
        %v229 = vld [vmem:[%s195 + $0x2] sm:$0x3]
        %v230 = vld [vmem:[%s195 + $0x4] sm:$0x3]
        %v231 = vld [vmem:[%s195 + $0x6] sm:$0x3]
        %v232 = vld [vmem:[%s195 + $0x8] sm:$0x3]
        %v233 = vld [vmem:[%s195 + $0xa] sm:$0x3]
        %v234 = vld [vmem:[%s195 + $0xc] sm:$0x3]
        %v235 = vld [vmem:[%s195 + $0xe] sm:$0x3]
        %v236 = vld [vmem:[%s195 + $0x10] sm:$0x3]
        %237 = vst [vmem:[%s213] sm:$0x3] %v236
        %v238 = vmul.f32 %v232, 1.442695
        %v239 = vpow.pop %v238
        %v240 = vmul.f32 %v233, 1.442695
        %v241 = vpow.pop %v240
        %v242 = vmul.f32 %v234, 1.442695
        %v243 = vpow.pop %v242
        %v244 = vmul.f32 %v235, 1.442695
        %v245 = vpow.pop %v244
        %246 = vst [vmem:[%s220] sm:$0x3] %v239
        %247 = vst [vmem:[%s220 + $0x2] sm:$0x3] %v241
        %248 = vst [vmem:[%s220 + $0x4] sm:$0x3] %v243
        %249 = vst [vmem:[%s220 + $0x6] sm:$0x3] %v245
        %vm250 = vcmask 1041408
        %v251 = vsel %vm250, %v228, -inf
        %v252 = vsel %vm250, %v229, -inf
        %v253 = vsel %vm250, %v230, -inf
        %v254 = vsel %vm250, %v231, -inf
        %v255 = vmax.f32 %v251, %v252
        %v256 = vmax.f32 %v253, %v254
        %v257 = vmax.f32 %v255, %v256
        %v258 = vsub.f32 %v228, %v257
        %v259 = vsub.f32 %v229, %v257
        %v260 = vsub.f32 %v230, %v257
        %v261 = vsub.f32 %v231, %v257
        %v262 = vmul.f32 %v258, 1.442695
        %v263 = vpow.pop %v262
        %v264 = vmul.f32 %v259, 1.442695
        %v265 = vpow.pop %v264
        %v266 = vmul.f32 %v260, 1.442695
        %v267 = vpow.pop %v266
        %v268 = vmul.f32 %v261, 1.442695
        %v269 = vpow.pop %v268
        %v270 = vsel %vm250, %v263, 0.0
        %v271 = vsel %vm250, %v265, 0.0
        %v272 = vadd.f32 %v270, %v271
        %v273 = vsel %vm250, %v267, 0.0
        %v274 = vadd.f32 %v272, %v273
        %v275 = vsel %vm250, %v269, 0.0
        %v276 = vadd.f32 %v274, %v275
        %v277 = vrcp.pop %v276
        %v278 = vmul.f32 %v263, %v277
        %v279 = vmul.f32 %v265, %v277
        %v280 = vmul.f32 %v267, %v277
        %v281 = vmul.f32 %v269, %v277
        %282 = vst [vmem:[%s227] sm:$0x3] %v278
        %283 = vst [vmem:[%s227 + $0x2] sm:$0x3] %v279
        %284 = vst [vmem:[%s227 + $0x4] sm:$0x3] %v280
        %285 = vst [vmem:[%s227 + $0x6] sm:$0x3] %v281
        %s286 = sand.u32 %s74, 1
        %s287 = scalar_lea.sflag [#allocation4], %s286
        %s288 = sand.u32 %s74, 1
        %s289 = smul.addr %s288, 2
        %s290 = scalar_lea.vmem [#allocation5], %s289
        %s291 = sand.u32 %s24, 1
        %s292 = scalar_lea.sflag [#allocation7], %s291
        %s293 = sand.u32 %s102, 1
        %s294 = smul.addr %s293, 8
        %s295 = scalar_lea.vmem [#allocation6], %s294
        %s296 = sand.u32 %s24, 1
        %s297 = scalar_lea.sflag [#allocation7], %s296
        %s298 = sand.u32 %s130, 1
        %s299 = smul.addr %s298, 8
        %s300 = scalar_lea.vmem [#allocation8], %s299
        // Predicated region
        $region29: #{tpu_custom_call.1} parent=23 // pred_check
          %p301 = pneg %p84
        $region30: #{tpu_custom_call.1} parent=23 // pred_check_branch
          %303 = sbr.rel (%p301) target = $region32
        $region31: #{tpu_custom_call.1} parent=23 // pred_region
          %s305 = ssub.s32 32, 32
          %306 = vsyncadd %s287, %s305
          %s307 = sadd.s32 %s29, %s28
          %s308 = smul.addr %s307, 32
          %s309 = scalar_lea.hbm %s1, %s308
          %s311 = sshll.u32 %s290, 4
          %s312 = int_to_ptr.vmem [resolvable:$true] %s311
          %314 = dma.vmem_to_hbm [thread:$0]  %s312, 32, %s309, %s287
        $region32: #{tpu_custom_call.1} parent=23 // pred_fallthru
          _
        // Predicated region
        $region33: #{tpu_custom_call.1} parent=23 // pred_check
          %p315 = pneg %p112
        $region34: #{tpu_custom_call.1} parent=23 // pred_check_branch
          %317 = sbr.rel (%p315) target = $region36
        $region35: #{tpu_custom_call.1} parent=23 // pred_region
          %s319 = ssub.s32 128, 128
          %320 = vsyncadd %s292, %s319
          %s321 = smul.addr %s28, 4
          %s322 = sadd.s32 %s29, %s321
          %s323 = smul.addr %s322, 32
          %s324 = scalar_lea.hbm %s2, %s323
          %s325 = sshll.u32 %s295, 4
          %s326 = int_to_ptr.vmem [resolvable:$true] %s325
          %331 = dma.vmem_to_hbm [thread:$0]  %s326, 128, %s324, %s292, 32, 32, 2
        $region36: #{tpu_custom_call.1} parent=23 // pred_fallthru
          _
        // Predicated region
        $region37: #{tpu_custom_call.1} parent=23 // pred_check
          %p332 = pneg %p140
        $region38: #{tpu_custom_call.1} parent=23 // pred_check_branch
          %334 = sbr.rel (%p332) target = $region40
        $region39: #{tpu_custom_call.1} parent=23 // pred_region
          %s336 = ssub.s32 128, 128
          %337 = vsyncadd %s297, %s336
          %s338 = smul.addr %s28, 4
          %s339 = sadd.s32 %s29, %s338
          %s340 = smul.addr %s339, 32
          %s341 = scalar_lea.hbm %s3, %s340
          %s342 = sshll.u32 %s300, 4
          %s343 = int_to_ptr.vmem [resolvable:$true] %s342
          %348 = dma.vmem_to_hbm [thread:$0]  %s343, 128, %s341, %s297, 32, 32, 2
        $region40: #{tpu_custom_call.1} parent=23 // pred_fallthru
          _
      $region24: #{tpu_custom_call.1} parent=5 // pred_fallthru
        _
      %p349 = scmp.le.s32.totalorder 2, %s19
      // Predicated region
      $region41: #{tpu_custom_call.1} parent=5 // pred_check
        %p350 = pneg %p349
      $region42: #{tpu_custom_call.1} parent=5 // pred_check_branch
        %352 = sbr.rel (%p350) target = $region44
      $region43: #{tpu_custom_call.1} parent=5 // pred_region
        %s353 = ssub.s32 %s19, 2
        // Predicated region
        $region45: #{tpu_custom_call.1} parent=43 // pred_check
          %p354 = pneg %p90
        $region46: #{tpu_custom_call.1} parent=43 // pred_check_branch
          %356 = sbr.rel (%p354) target = $region48
        $region47: #{tpu_custom_call.1} parent=43 // pred_region
          %s357 = sand.u32 %s75, 1
          %s358 = scalar_lea.sflag [#allocation4], %s357
          %s359 = sand.u32 %s75, 1
          %s360 = smul.addr %s359, 2
          %s361 = scalar_lea.vmem [#allocation5], %s360
          %362 = dma.done %s358, 32
        $region48: #{tpu_custom_call.1} parent=43 // pred_fallthru
          _
        // Predicated region
        $region49: #{tpu_custom_call.1} parent=43 // pred_check
          %p363 = pneg %p118
        $region50: #{tpu_custom_call.1} parent=43 // pred_check_branch
          %365 = sbr.rel (%p363) target = $region52
        $region51: #{tpu_custom_call.1} parent=43 // pred_region
          %s366 = sand.u32 %s25, 1
          %s367 = scalar_lea.sflag [#allocation7], %s366
          %s368 = sand.u32 %s103, 1
          %s369 = smul.addr %s368, 8
          %s370 = scalar_lea.vmem [#allocation6], %s369
          %371 = dma.done %s367, 128
        $region52: #{tpu_custom_call.1} parent=43 // pred_fallthru
          _
        // Predicated region
        $region53: #{tpu_custom_call.1} parent=43 // pred_check
          %p372 = pneg %p146
        $region54: #{tpu_custom_call.1} parent=43 // pred_check_branch
          %374 = sbr.rel (%p372) target = $region56
        $region55: #{tpu_custom_call.1} parent=43 // pred_region
          %s375 = sand.u32 %s25, 1
          %s376 = scalar_lea.sflag [#allocation7], %s375
          %s377 = sand.u32 %s131, 1
          %s378 = smul.addr %s377, 8
          %s379 = scalar_lea.vmem [#allocation8], %s378
          %380 = dma.done %s376, 128
        $region56: #{tpu_custom_call.1} parent=43 // pred_fallthru
          _
      $region44: #{tpu_custom_call.1} parent=5 // pred_fallthru
        _
    $region6: #{tpu_custom_call.1} parent=1 // loop_footer
      %s23 = sadd.s32 1, %s19
    $region7: #{tpu_custom_call.1} parent=1 // loop_footer_branch
      %18 = sbr.rel target = $region3
    $region8: #{tpu_custom_call.1} parent=1 // loop_exit
      _
    %381 = vsyncpa [#allocation3], 1
    %s382 = scalar_lea.sflag [#allocation3], 1
    %383 = vsyncpa %s382, 1
    %384 = vsyncpa [#allocation4], 1
    %s385 = scalar_lea.sflag [#allocation4], 1
    %386 = vsyncpa %s385, 1
    %387 = vsyncpa [#allocation7], 1
    %s388 = scalar_lea.sflag [#allocation7], 1
    %389 = vsyncpa %s388, 1

</llo_original>
